<compile_context>
chip_gen: v6e
topology: v6e:2x2x1
jax: 0.10.0
libtpu: 0.0.40
codegen_flags: <defaults>
</compile_context>

<pallas_src>
import jax
import jax.numpy as jnp
from jax.experimental import pallas as pl
from jax.experimental.pallas import tpu as pltpu


def _dma_copy_kernel(x_hbm_ref, o_hbm_ref, copy_sem):
    # Whole-array HBM->HBM DMA: no VMEM staging, no grid, no layout plumbing.
    cp = pltpu.make_async_copy(x_hbm_ref, o_hbm_ref, copy_sem)
    cp.start()
    cp.wait()


@jax.jit
def _device_copy(img):
    nbytes = img.size * jnp.dtype(img.dtype).itemsize
    return pl.pallas_call(
        _dma_copy_kernel,
        out_shape=jax.ShapeDtypeStruct(img.shape, img.dtype),
        in_specs=[pl.BlockSpec(memory_space=pl.ANY)],
        out_specs=pl.BlockSpec(memory_space=pl.ANY),
        scratch_shapes=[pltpu.SemaphoreType.DMA(())],
        # Pure-bandwidth op: help XLA overlap it with neighbouring compute.
        cost_estimate=pl.CostEstimate(
            flops=0, transcendentals=0, bytes_accessed=2 * nbytes
        ),
    )(img)


def color_jitter_forward(img, brightness=0, contrast=0, saturation=0, hue=0,
                         *, copy=False):
    """Pallas/JAX implementation of the (stub) ColorJitter.forward.

    The reference forward is an exact identity, so by default this returns
    `img` unchanged with zero HBM traffic.  Pass `copy=True` to force a fresh
    on-device copy via a single HBM->HBM DMA Pallas kernel.
    """
    del brightness, contrast, saturation, hue  # unused by the stub forward
    if not copy or img.size == 0:
        # JAX arrays are immutable: returning the input is a correct — and
        # free — identity, matching the reference semantics exactly.
        return img
    return _device_copy(img)


class ColorJitter:
    """JAX/Pallas mirror of the pytea ColorJitter stub."""

    def __init__(self, brightness=0, contrast=0, saturation=0, hue=0):
        self.brightness = brightness
        self.contrast = contrast
        self.saturation = saturation
        self.hue = hue

    def __call__(self, img, *, copy=False):
        if not isinstance(img, (jnp.ndarray, jax.Array)):
            raise TypeError('img should be PIL Image or Tensor')
        # TODO(synk): PIL.Image inputs are passed through in the reference;
        # only array (Tensor) inputs are supported here.
        return color_jitter_forward(
            img, self.brightness, self.contrast, self.saturation, self.hue,
            copy=copy,
        )


if __name__ == "__main__":
    key = jax.random.PRNGKey(0)
    module = ColorJitter(brightness=0.4, contrast=0.4, saturation=0.4, hue=0.1)

    # NCHW image batch: batch=2, channels=4, H=W=16 (f32).
    x = jax.random.uniform(key, (2, 4, 16, 16), dtype=jnp.float32)

    # Default path: zero-cost identity (no kernel, no HBM traffic).
    y = jax.block_until_ready(module(x))
    assert y.shape == x.shape
    assert y.dtype == x.dtype
    assert bool(jnp.all(y == x))

    # Explicit on-device copy path: grid-less Pallas HBM->HBM DMA kernel.
    y_copy = jax.block_until_ready(module(x, copy=True))
    assert y_copy.shape == x.shape
    assert y_copy.dtype == x.dtype
    assert bool(jnp.all(y_copy == x))

    # Odd-sized f32 image (non-aligned flat size; no pad/slice needed now).
    x_odd = jax.random.uniform(jax.random.PRNGKey(1), (3, 3, 5, 7),
                               dtype=jnp.float32)
    y_odd = jax.block_until_ready(module(x_odd, copy=True))
    assert y_odd.shape == x_odd.shape
    assert y_odd.dtype == x_odd.dtype
    assert bool(jnp.all(y_odd == x_odd))

    # bf16 image (sub-32-bit dtype goes straight through the DMA copy).
    x_bf16 = jax.random.uniform(jax.random.PRNGKey(2), (2, 3, 16, 16),
                                dtype=jnp.bfloat16)
    y_bf16 = jax.block_until_ready(module(x_bf16, copy=True))
    assert y_bf16.shape == x_bf16.shape
    assert y_bf16.dtype == x_bf16.dtype
    assert bool(jnp.all(y_bf16 == x_bf16))

    print("KERNEL_OK")
</pallas_src>

<mosaic_0001>
module attributes {stable_mosaic.version = 11 : i64} {
  func.func @_dma_copy_kernel(%arg0: memref<2x4x16x16xf32, #tpu.memory_space<any>>, %arg1: memref<2x4x16x16xf32, #tpu.memory_space<any>>, %arg2: memref<!tpu.dma_semaphore, #tpu.memory_space<semaphore_mem>>) attributes {dimension_semantics = [], scalar_prefetch = 0 : i64, scratch_operands = 1 : i64, tpu.core_type = #tpu.core_type<tc>} {
    tpu.enqueue_dma source(%arg0 : memref<2x4x16x16xf32, #tpu.memory_space<any>>) target(%arg1 : memref<2x4x16x16xf32, #tpu.memory_space<any>>) target_semaphore(%arg2 : memref<!tpu.dma_semaphore, #tpu.memory_space<semaphore_mem>>)
    tpu.wait_dma2 semaphore(%arg2 : memref<!tpu.dma_semaphore, #tpu.memory_space<semaphore_mem>>) src(%arg0 : memref<2x4x16x16xf32, #tpu.memory_space<any>>) dst(%arg1 : memref<2x4x16x16xf32, #tpu.memory_space<any>>)
    return
  }
}

</mosaic_0001>

<llo_original>
// kernel: _device_copy.1
$region0: #{_device_copy.1}
  #allocation0 [shape = 'u32[]', space=smem, size = 0x4, offset = 0x4, fixed_abs, tag = 'smem constant byte address 0x4 - core index']
  #allocation1 [shape = 'u32[144,128]{1,0:T(1,128)}', space=vmem, size = 0x12000, scoped, tag = 'internal scratch']
  #allocation2 [shape = 's32[1]{0}', space=sflag, size = 0x4, scoped, tag = 'scratch operand']
  #allocation3 [shape = 's32[]', space=sflag, size = 0x4, offset = 0, fixed_abs, tag = 'sflag constant byte address 0x0 - dummy sync flag']
  #allocation4 [shape = 'u32[0]{0}', space=smem, size = 0, offset = 0, fixed_abs, tag = 'smem constant byte address 0x0 - null']
  %s0 = inlined_call_operand.hbm [shape: f32[2,4,16,16], index: 0, kind: input, shape index: {}]
  %s1 = inlined_call_operand.hbm [shape: f32[2,4,16,16], index: 1, kind: output, shape index: {}]
  %s2 = sld [smem:[#allocation0]]
  $region2: #{_device_copy.1} parent=0
    _
  %s4 = ssub.s32 1, %s2
  %s5 = scalar_select 0, %s4, %s2
  %s7 = sshll.u32 1, 14
  %s8 = sxor.u32 4294967295, %s7
  %12 = dma.general %s0, 2048, %s1, [#allocation2], 131072, [#allocation4], 0, 0
  %s13 = smul.u32 2, 4
  %s14 = smul.u32 %s13, 16
  %s15 = smul.u32 %s14, 1
  %s16 = sshll.u32 %s15, 4
  %17 = dma.done [#allocation2], %s16
  %18 = vsyncmov [#allocation2]
  %s19 = vpop.sfrf %18
  %p20 = scmp.eq.s32.totalorder %s19, 0
  %p21 = pneg %p20
  %23 = shalt.err (%p21)

</llo_original>
